<compile_context>
chip_gen: v5e
topology: v5e:2x2
jax: 0.10.0
libtpu: 0.0.40
codegen_flags: <defaults>
</compile_context>

<pallas_src>
import functools

import numpy as np
import jax
import jax.numpy as jnp
from jax import lax
from jax.experimental import pallas as pl
from jax.experimental.pallas import tpu as pltpu

# Small, self-consistent shapes (num_heads * head_size == n_embed).
N_EMBED = 32
NUM_HEADS = 4
HEAD_SIZE = N_EMBED // NUM_HEADS
BATCH = 2
SEQ = 8


def _mha_kernel(x_ref, w_ref, b_ref, cos_ref, sin_ref, wp_ref, bp_ref, o_ref,
                *, num_heads):
    """One grid step handles a block of BB batch elements; all heads fused."""
    BB, T, E = x_ref.shape
    HHS = cos_ref.shape[1]            # num_heads * head_size
    hs = HHS // num_heads

    # --- one wide projection matmul: Q, Q@P, K, K@P, V for all heads at once.
    x2 = x_ref[...].reshape(BB * T, E)
    proj = jnp.dot(x2, w_ref[...], preferred_element_type=jnp.float32) + b_ref[...]

    def block(i):
        return proj[:, i * HHS:(i + 1) * HHS].reshape(BB, T, HHS)

    cos = cos_ref[...]                # (T, HHS) head-tiled interleaved cos
    sin = sin_ref[...]                # (T, HHS)
    # RoPE rotation (and the C**-0.5 scale on the Q path) were folded into W_all.
    q = block(0) * cos + block(1) * sin
    k = block(2) * cos + block(3) * sin
    v = block(4)

    # Causal mask — hoisted out of the head loop; finite sentinel avoids any
    # -inf - -inf -> NaN hazard.
    row = lax.broadcasted_iota(jnp.int32, (T, T), 0)
    col = lax.broadcasted_iota(jnp.int32, (T, T), 1)
    causal = (row >= col)[None]       # (1, T, T)
    neg_big = jnp.float32(-1e30)

    heads = []
    for h in range(num_heads):        # static -> unrolled
        sl = slice(h * hs, (h + 1) * hs)
        qh, kh, vh = q[:, :, sl], k[:, :, sl], v[:, :, sl]
        # scores batched over the batch block (scale already folded into Wq).
        s = jnp.einsum('btd,bsd->bts', qh, kh,
                       preferred_element_type=jnp.float32)
        s = jnp.where(causal, s, neg_big)
        s = s - jnp.max(s, axis=-1, keepdims=True)
        p = jnp.exp(s)
        p = p * pl.reciprocal(jnp.sum(p, axis=-1, keepdims=True), approx=True)
        heads.append(jnp.einsum('bts,bsd->btd', p, vh,
                                preferred_element_type=jnp.float32))

    # cat(heads) @ Wp^T + bp as ONE matmul.
    att = jnp.concatenate(heads, axis=-1).reshape(BB * T, HHS)
    out = jnp.dot(att, wp_ref[...], preferred_element_type=jnp.float32) + bp_ref[...]
    o_ref[...] = out.reshape(BB, T, E).astype(o_ref.dtype)


def _pick_batch_block(B):
    """One grid step on single-TC chips (v5e/v6e); batch-parallel on 2-TC chips."""
    try:
        kind = jax.devices()[0].device_kind.lower()
    except Exception:
        return B
    dual_tc = any(tag in kind for tag in ("v7", "7x", "v5p", "v4"))
    if dual_tc and B % 2 == 0:
        return B // 2
    return B


def multi_head_attention(x, w_all, b_all, cosf, sinf, wpT, bp, num_heads,
                         batch_block=None):
    B, T, E = x.shape
    W5 = w_all.shape[1]
    HHS = cosf.shape[1]
    BB = _pick_batch_block(B) if batch_block is None else batch_block
    assert B % BB == 0

    in_specs = [
        pl.BlockSpec((BB, T, E), lambda b: (b, 0, 0)),    # x
        pl.BlockSpec((E, W5), lambda b: (0, 0)),          # fused QKV(+rot) weights
        pl.BlockSpec((1, W5), lambda b: (0, 0)),          # fused biases
        pl.BlockSpec((T, HHS), lambda b: (0, 0)),         # cos table
        pl.BlockSpec((T, HHS), lambda b: (0, 0)),         # sin table
        pl.BlockSpec((HHS, E), lambda b: (0, 0)),         # Wp^T
        pl.BlockSpec((1, E), lambda b: (0, 0)),           # bp
    ]
    out_specs = pl.BlockSpec((BB, T, E), lambda b: (b, 0, 0))

    return pl.pallas_call(
        functools.partial(_mha_kernel, num_heads=num_heads),
        out_shape=jax.ShapeDtypeStruct((B, T, E), x.dtype),
        grid=(B // BB,),
        in_specs=in_specs,
        out_specs=out_specs,
        compiler_params=pltpu.CompilerParams(
            dimension_semantics=("parallel",)),
    )(x, w_all, b_all, cosf, sinf, wpT, bp)


def _build_rope_tables(T, dim):
    # Faithful to the PyTorch code (integer division makes every freq == 1).
    exponents = np.arange(0, dim, 2)[: dim // 2] // dim             # all zeros
    fres = 1.0 / np.power(1000.0, exponents).astype(np.float32)     # all ones
    pos = np.arange(T).astype(np.float32)
    theta = np.outer(pos, fres).astype(np.float32)                  # (T, dim//2)
    cos_full = np.repeat(np.cos(theta), 2, axis=1)                  # (T, dim)
    sin_full = np.repeat(np.sin(theta), 2, axis=1)                  # (T, dim)
    # pair-rotation matrix: (q @ P)[2j] = -q[2j+1], (q @ P)[2j+1] = q[2j]
    P = np.zeros((dim, dim), np.float32)
    for j in range(dim // 2):
        P[2 * j + 1, 2 * j] = -1.0
        P[2 * j, 2 * j + 1] = 1.0
    return cos_full, sin_full, P


def prepare_params(wq, bq, wk, bk, wv, bv, wp, bp, T):
    """Host-side fusion: QKV weights + RoPE rotation + attention scale."""
    H, hs, E = wq.shape
    HHS = H * hs
    scale = E ** (-0.5)            # PyTorch uses C**-0.5 with C = n_embed
    cos_hs, sin_hs, P_np = _build_rope_tables(T, hs)
    P = jnp.asarray(P_np)

    def stackT(w):                 # (H, hs, E) -> (E, H*hs), columns ordered (h, j)
        return jnp.transpose(w, (2, 0, 1)).reshape(E, HHS)

    def rot_fold(Wt):              # fold per-head RoPE rotation into the weights
        return jnp.einsum('ehd,df->ehf', Wt.reshape(E, H, hs), P).reshape(E, HHS)

    WqT, WkT, WvT = stackT(wq), stackT(wk), stackT(wv)
    WqP, WkP = rot_fold(WqT), rot_fold(WkT)
    bqf, bkf, bvf = bq.reshape(HHS), bk.reshape(HHS), bv.reshape(HHS)
    bqP, bkP = (bq @ P).reshape(HHS), (bk @ P).reshape(HHS)

    w_all = jnp.concatenate([WqT * scale, WqP * scale, WkT, WkP, WvT], axis=1)
    b_all = jnp.concatenate(
        [bqf * scale, bqP * scale, bkf, bkP, bvf]).reshape(1, 5 * HHS)
    cosf = jnp.asarray(np.tile(cos_hs, (1, H)))     # (T, HHS)
    sinf = jnp.asarray(np.tile(sin_hs, (1, H)))
    wpT = wp.T                                      # cat(heads) @ wp.T
    bp2 = bp.reshape(1, E)
    return w_all, b_all, cosf, sinf, wpT, bp2


def _reference(x, wq, bq, wk, bk, wv, bv, wp, bp, cosf, sinf, P):
    # Pure-JAX mirror of the PyTorch forward (sanity check).
    B, T, E = x.shape
    H = wq.shape[0]
    mask = np.tril(np.ones((T, T), dtype=bool))

    def rope(t):
        return t * cosf + (t @ P) * sinf

    outs = []
    for h in range(H):
        q = rope(x @ wq[h].T + bq[h])
        k = rope(x @ wk[h].T + bk[h])
        wei = jnp.einsum('btd,bsd->bts', q, k) * E ** (-0.5)
        wei = jnp.where(mask, wei, -jnp.inf)
        wei = jax.nn.softmax(wei, axis=-1)
        v = x @ wv[h].T + bv[h]
        outs.append(wei @ v)
    cat = jnp.concatenate(outs, axis=-1)
    return cat @ wp.T + bp


if __name__ == "__main__":
    H, hs, E, B, T = NUM_HEADS, HEAD_SIZE, N_EMBED, BATCH, SEQ

    key = jax.random.PRNGKey(0)
    ks = jax.random.split(key, 9)
    # nn.Linear(n_embed, head_size): weight (head_size, n_embed), bias (head_size,)
    wq = jax.random.normal(ks[0], (H, hs, E), jnp.float32) * 0.1
    bq = jax.random.normal(ks[1], (H, hs), jnp.float32) * 0.1
    wk = jax.random.normal(ks[2], (H, hs, E), jnp.float32) * 0.1
    bk = jax.random.normal(ks[3], (H, hs), jnp.float32) * 0.1
    wv = jax.random.normal(ks[4], (H, hs, E), jnp.float32) * 0.1
    bv = jax.random.normal(ks[5], (H, hs), jnp.float32) * 0.1
    # nn.Linear(n_embed, n_embed): weight (E, E), bias (E,)
    wp = jax.random.normal(ks[6], (E, E), jnp.float32) * 0.1
    bp = jax.random.normal(ks[7], (E,), jnp.float32) * 0.1
    x = jax.random.normal(ks[8], (B, T, E), jnp.float32)

    # Host-side fused parameter layouts.
    w_all, b_all, cosf, sinf, wpT, bp2 = prepare_params(
        wq, bq, wk, bk, wv, bv, wp, bp, T)

    out = multi_head_attention(x, w_all, b_all, cosf, sinf, wpT, bp2, H)
    out = jax.block_until_ready(out)

    cos_hs, sin_hs, P_np = _build_rope_tables(T, hs)
    ref = _reference(x, wq, bq, wk, bk, wv, bv, wp, bp,
                     jnp.asarray(cos_hs), jnp.asarray(sin_hs), jnp.asarray(P_np))
    assert out.shape == (B, T, E)
    assert np.allclose(np.asarray(out), np.asarray(ref), atol=2e-2, rtol=2e-2)

    print("KERNEL_OK")
</pallas_src>

<mosaic_0001>
module attributes {stable_mosaic.version = 11 : i64} {
  func.func @_mha_kernel(%arg0: i32, %arg1: memref<2x8x32xf32, #tpu.memory_space<vmem>>, %arg2: memref<32x160xf32, #tpu.memory_space<vmem>>, %arg3: memref<1x160xf32, #tpu.memory_space<vmem>>, %arg4: memref<8x32xf32, #tpu.memory_space<vmem>>, %arg5: memref<8x32xf32, #tpu.memory_space<vmem>>, %arg6: memref<32x32xf32, #tpu.memory_space<vmem>>, %arg7: memref<1x32xf32, #tpu.memory_space<vmem>>, %arg8: memref<2x8x32xf32, #tpu.memory_space<vmem>>) attributes {dimension_semantics = [#tpu.dimension_semantics<parallel>], iteration_bounds = array<i64: 1>, scalar_prefetch = 0 : i64, scratch_operands = 0 : i64, tpu.core_type = #tpu.core_type<tc>, window_params = [{transform_indices = @transform_0, window_bounds = array<i64: 2, 8, 32>}, {pipeline_mode = #tpu.pipeline_mode<synchronous>, transform_indices = @transform_1, window_bounds = array<i64: 32, 160>}, {pipeline_mode = #tpu.pipeline_mode<synchronous>, transform_indices = @transform_2, window_bounds = array<i64: 1, 160>}, {pipeline_mode = #tpu.pipeline_mode<synchronous>, transform_indices = @transform_3, window_bounds = array<i64: 8, 32>}, {pipeline_mode = #tpu.pipeline_mode<synchronous>, transform_indices = @transform_4, window_bounds = array<i64: 8, 32>}, {pipeline_mode = #tpu.pipeline_mode<synchronous>, transform_indices = @transform_5, window_bounds = array<i64: 32, 32>}, {pipeline_mode = #tpu.pipeline_mode<synchronous>, transform_indices = @transform_6, window_bounds = array<i64: 1, 32>}, {transform_indices = @transform_7, window_bounds = array<i64: 2, 8, 32>}]} {
    %c0 = arith.constant 0 : index
    %c0_0 = arith.constant 0 : index
    %c0_1 = arith.constant 0 : index
    %0 = vector.load %arg1[%c0, %c0_0, %c0_1] : memref<2x8x32xf32, #tpu.memory_space<vmem>>, vector<2x8x32xf32>
    %1 = vector.shape_cast %0 : vector<2x8x32xf32> to vector<16x32xf32>
    %c0_2 = arith.constant 0 : index
    %c0_3 = arith.constant 0 : index
    %2 = vector.load %arg2[%c0_2, %c0_3] : memref<32x160xf32, #tpu.memory_space<vmem>>, vector<32x160xf32>
    %cst = arith.constant dense<0.000000e+00> : vector<16x160xf32>
    %3 = tpu.matmul %1, %2, %cst {dimension_numbers = #tpu.dot_dimension_numbers<[1], [0], [0], [1], [0, 0, 1, 1], [], []>} : vector<16x32xf32>, vector<32x160xf32>, vector<16x160xf32> -> vector<16x160xf32>
    %c0_4 = arith.constant 0 : index
    %c0_5 = arith.constant 0 : index
    %4 = vector.load %arg3[%c0_4, %c0_5] : memref<1x160xf32, #tpu.memory_space<vmem>>, vector<1x160xf32>
    %5 = vector.broadcast %4 : vector<1x160xf32> to vector<16x160xf32>
    %6 = arith.addf %3, %5 : vector<16x160xf32>
    %c0_6 = arith.constant 0 : index
    %c0_7 = arith.constant 0 : index
    %7 = vector.load %arg4[%c0_6, %c0_7] : memref<8x32xf32, #tpu.memory_space<vmem>>, vector<8x32xf32>
    %c0_8 = arith.constant 0 : index
    %c0_9 = arith.constant 0 : index
    %8 = vector.load %arg5[%c0_8, %c0_9] : memref<8x32xf32, #tpu.memory_space<vmem>>, vector<8x32xf32>
    %9 = vector.extract_strided_slice %6 {offsets = [0, 0], sizes = [16, 32], strides = [1, 1]} : vector<16x160xf32> to vector<16x32xf32>
    %10 = vector.shape_cast %9 : vector<16x32xf32> to vector<2x8x32xf32>
    %11 = vector.shape_cast %7 : vector<8x32xf32> to vector<1x8x32xf32>
    %12 = vector.broadcast %11 : vector<1x8x32xf32> to vector<2x8x32xf32>
    %13 = arith.mulf %10, %12 : vector<2x8x32xf32>
    %14 = vector.extract_strided_slice %6 {offsets = [0, 32], sizes = [16, 32], strides = [1, 1]} : vector<16x160xf32> to vector<16x32xf32>
    %15 = vector.shape_cast %14 : vector<16x32xf32> to vector<2x8x32xf32>
    %16 = vector.shape_cast %8 : vector<8x32xf32> to vector<1x8x32xf32>
    %17 = vector.broadcast %16 : vector<1x8x32xf32> to vector<2x8x32xf32>
    %18 = arith.mulf %15, %17 : vector<2x8x32xf32>
    %19 = arith.addf %13, %18 : vector<2x8x32xf32>
    %20 = vector.extract_strided_slice %6 {offsets = [0, 64], sizes = [16, 32], strides = [1, 1]} : vector<16x160xf32> to vector<16x32xf32>
    %21 = vector.shape_cast %20 : vector<16x32xf32> to vector<2x8x32xf32>
    %22 = vector.shape_cast %7 : vector<8x32xf32> to vector<1x8x32xf32>
    %23 = vector.broadcast %22 : vector<1x8x32xf32> to vector<2x8x32xf32>
    %24 = arith.mulf %21, %23 : vector<2x8x32xf32>
    %25 = vector.extract_strided_slice %6 {offsets = [0, 96], sizes = [16, 32], strides = [1, 1]} : vector<16x160xf32> to vector<16x32xf32>
    %26 = vector.shape_cast %25 : vector<16x32xf32> to vector<2x8x32xf32>
    %27 = vector.shape_cast %8 : vector<8x32xf32> to vector<1x8x32xf32>
    %28 = vector.broadcast %27 : vector<1x8x32xf32> to vector<2x8x32xf32>
    %29 = arith.mulf %26, %28 : vector<2x8x32xf32>
    %30 = arith.addf %24, %29 : vector<2x8x32xf32>
    %31 = vector.extract_strided_slice %6 {offsets = [0, 128], sizes = [16, 32], strides = [1, 1]} : vector<16x160xf32> to vector<16x32xf32>
    %32 = vector.shape_cast %31 : vector<16x32xf32> to vector<2x8x32xf32>
    %33 = tpu.iota {dimensions = array<i32: 0>} : vector<8x8xi32>
    %34 = tpu.iota {dimensions = array<i32: 1>} : vector<8x8xi32>
    %35 = arith.cmpi sge, %33, %34 : vector<8x8xi32>
    %36 = vector.shape_cast %35 : vector<8x8xi1> to vector<1x8x8xi1>
    %37 = vector.extract_strided_slice %19 {offsets = [0, 0, 0], sizes = [2, 8, 8], strides = [1, 1, 1]} : vector<2x8x32xf32> to vector<2x8x8xf32>
    %38 = vector.extract_strided_slice %30 {offsets = [0, 0, 0], sizes = [2, 8, 8], strides = [1, 1, 1]} : vector<2x8x32xf32> to vector<2x8x8xf32>
    %39 = vector.extract_strided_slice %32 {offsets = [0, 0, 0], sizes = [2, 8, 8], strides = [1, 1, 1]} : vector<2x8x32xf32> to vector<2x8x8xf32>
    "tpu.trace_start"() <{level = 10 : i32, message = "btd,bsd->bts"}> : () -> ()
    %cst_10 = arith.constant dense<0.000000e+00> : vector<2x8x8xf32>
    %40 = tpu.matmul %37, %38, %cst_10 {dimension_numbers = #tpu.dot_dimension_numbers<[2], [2], [1], [1], [0, 0, 0, 1, 1, 1], [0], [0]>} : vector<2x8x8xf32>, vector<2x8x8xf32>, vector<2x8x8xf32> -> vector<2x8x8xf32>
    %cst_11 = arith.constant -1.000000e+30 : f32
    "tpu.trace_stop"() : () -> ()
    %41 = vector.shape_cast %36 : vector<1x8x8xi1> to vector<1x8x8xi1>
    %42 = vector.broadcast %41 : vector<1x8x8xi1> to vector<2x8x8xi1>
    %43 = vector.broadcast %cst_11 : f32 to vector<2x8x8xf32>
    %44 = arith.select %42, %40, %43 : vector<2x8x8xi1>, vector<2x8x8xf32>
    %cst_12 = arith.constant dense<0xFF800000> : vector<2x8xf32>
    %45 = vector.multi_reduction <maximumf>, %44, %cst_12 [2] : vector<2x8x8xf32> to vector<2x8xf32>
    %46 = vector.shape_cast %45 : vector<2x8xf32> to vector<2x8x1xf32>
    %47 = vector.broadcast %46 : vector<2x8x1xf32> to vector<2x8x8xf32>
    %48 = arith.subf %44, %47 : vector<2x8x8xf32>
    %49 = math.exp %48 : vector<2x8x8xf32>
    %cst_13 = arith.constant dense<0.000000e+00> : vector<2x8xf32>
    %50 = vector.multi_reduction <add>, %49, %cst_13 [2] : vector<2x8x8xf32> to vector<2x8xf32>
    %51 = vector.shape_cast %50 : vector<2x8xf32> to vector<2x8x1xf32>
    %52 = tpu.reciprocal %51 {approx = true} : vector<2x8x1xf32> -> vector<2x8x1xf32>
    %53 = vector.broadcast %52 : vector<2x8x1xf32> to vector<2x8x8xf32>
    %54 = arith.mulf %49, %53 : vector<2x8x8xf32>
    "tpu.trace_start"() <{level = 10 : i32, message = "bts,bsd->btd"}> : () -> ()
    %cst_14 = arith.constant dense<0.000000e+00> : vector<2x8x8xf32>
    %55 = tpu.matmul %54, %39, %cst_14 {dimension_numbers = #tpu.dot_dimension_numbers<[2], [1], [1], [2], [0, 0, 0, 1, 1, 2], [0], [0]>} : vector<2x8x8xf32>, vector<2x8x8xf32>, vector<2x8x8xf32> -> vector<2x8x8xf32>
    "tpu.trace_stop"() : () -> ()
    %56 = vector.extract_strided_slice %19 {offsets = [0, 0, 8], sizes = [2, 8, 8], strides = [1, 1, 1]} : vector<2x8x32xf32> to vector<2x8x8xf32>
    %57 = vector.extract_strided_slice %30 {offsets = [0, 0, 8], sizes = [2, 8, 8], strides = [1, 1, 1]} : vector<2x8x32xf32> to vector<2x8x8xf32>
    %58 = vector.extract_strided_slice %32 {offsets = [0, 0, 8], sizes = [2, 8, 8], strides = [1, 1, 1]} : vector<2x8x32xf32> to vector<2x8x8xf32>
    "tpu.trace_start"() <{level = 10 : i32, message = "btd,bsd->bts"}> : () -> ()
    %cst_15 = arith.constant dense<0.000000e+00> : vector<2x8x8xf32>
    %59 = tpu.matmul %56, %57, %cst_15 {dimension_numbers = #tpu.dot_dimension_numbers<[2], [2], [1], [1], [0, 0, 0, 1, 1, 1], [0], [0]>} : vector<2x8x8xf32>, vector<2x8x8xf32>, vector<2x8x8xf32> -> vector<2x8x8xf32>
    %cst_16 = arith.constant -1.000000e+30 : f32
    "tpu.trace_stop"() : () -> ()
    %60 = vector.shape_cast %36 : vector<1x8x8xi1> to vector<1x8x8xi1>
    %61 = vector.broadcast %60 : vector<1x8x8xi1> to vector<2x8x8xi1>
    %62 = vector.broadcast %cst_16 : f32 to vector<2x8x8xf32>
    %63 = arith.select %61, %59, %62 : vector<2x8x8xi1>, vector<2x8x8xf32>
    %cst_17 = arith.constant dense<0xFF800000> : vector<2x8xf32>
    %64 = vector.multi_reduction <maximumf>, %63, %cst_17 [2] : vector<2x8x8xf32> to vector<2x8xf32>
    %65 = vector.shape_cast %64 : vector<2x8xf32> to vector<2x8x1xf32>
    %66 = vector.broadcast %65 : vector<2x8x1xf32> to vector<2x8x8xf32>
    %67 = arith.subf %63, %66 : vector<2x8x8xf32>
    %68 = math.exp %67 : vector<2x8x8xf32>
    %cst_18 = arith.constant dense<0.000000e+00> : vector<2x8xf32>
    %69 = vector.multi_reduction <add>, %68, %cst_18 [2] : vector<2x8x8xf32> to vector<2x8xf32>
    %70 = vector.shape_cast %69 : vector<2x8xf32> to vector<2x8x1xf32>
    %71 = tpu.reciprocal %70 {approx = true} : vector<2x8x1xf32> -> vector<2x8x1xf32>
    %72 = vector.broadcast %71 : vector<2x8x1xf32> to vector<2x8x8xf32>
    %73 = arith.mulf %68, %72 : vector<2x8x8xf32>
    "tpu.trace_start"() <{level = 10 : i32, message = "bts,bsd->btd"}> : () -> ()
    %cst_19 = arith.constant dense<0.000000e+00> : vector<2x8x8xf32>
    %74 = tpu.matmul %73, %58, %cst_19 {dimension_numbers = #tpu.dot_dimension_numbers<[2], [1], [1], [2], [0, 0, 0, 1, 1, 2], [0], [0]>} : vector<2x8x8xf32>, vector<2x8x8xf32>, vector<2x8x8xf32> -> vector<2x8x8xf32>
    "tpu.trace_stop"() : () -> ()
    %75 = vector.extract_strided_slice %19 {offsets = [0, 0, 16], sizes = [2, 8, 8], strides = [1, 1, 1]} : vector<2x8x32xf32> to vector<2x8x8xf32>
    %76 = vector.extract_strided_slice %30 {offsets = [0, 0, 16], sizes = [2, 8, 8], strides = [1, 1, 1]} : vector<2x8x32xf32> to vector<2x8x8xf32>
    %77 = vector.extract_strided_slice %32 {offsets = [0, 0, 16], sizes = [2, 8, 8], strides = [1, 1, 1]} : vector<2x8x32xf32> to vector<2x8x8xf32>
    "tpu.trace_start"() <{level = 10 : i32, message = "btd,bsd->bts"}> : () -> ()
    %cst_20 = arith.constant dense<0.000000e+00> : vector<2x8x8xf32>
    %78 = tpu.matmul %75, %76, %cst_20 {dimension_numbers = #tpu.dot_dimension_numbers<[2], [2], [1], [1], [0, 0, 0, 1, 1, 1], [0], [0]>} : vector<2x8x8xf32>, vector<2x8x8xf32>, vector<2x8x8xf32> -> vector<2x8x8xf32>
    %cst_21 = arith.constant -1.000000e+30 : f32
    "tpu.trace_stop"() : () -> ()
    %79 = vector.shape_cast %36 : vector<1x8x8xi1> to vector<1x8x8xi1>
    %80 = vector.broadcast %79 : vector<1x8x8xi1> to vector<2x8x8xi1>
    %81 = vector.broadcast %cst_21 : f32 to vector<2x8x8xf32>
    %82 = arith.select %80, %78, %81 : vector<2x8x8xi1>, vector<2x8x8xf32>
    %cst_22 = arith.constant dense<0xFF800000> : vector<2x8xf32>
    %83 = vector.multi_reduction <maximumf>, %82, %cst_22 [2] : vector<2x8x8xf32> to vector<2x8xf32>
    %84 = vector.shape_cast %83 : vector<2x8xf32> to vector<2x8x1xf32>
    %85 = vector.broadcast %84 : vector<2x8x1xf32> to vector<2x8x8xf32>
    %86 = arith.subf %82, %85 : vector<2x8x8xf32>
    %87 = math.exp %86 : vector<2x8x8xf32>
    %cst_23 = arith.constant dense<0.000000e+00> : vector<2x8xf32>
    %88 = vector.multi_reduction <add>, %87, %cst_23 [2] : vector<2x8x8xf32> to vector<2x8xf32>
    %89 = vector.shape_cast %88 : vector<2x8xf32> to vector<2x8x1xf32>
    %90 = tpu.reciprocal %89 {approx = true} : vector<2x8x1xf32> -> vector<2x8x1xf32>
    %91 = vector.broadcast %90 : vector<2x8x1xf32> to vector<2x8x8xf32>
    %92 = arith.mulf %87, %91 : vector<2x8x8xf32>
    "tpu.trace_start"() <{level = 10 : i32, message = "bts,bsd->btd"}> : () -> ()
    %cst_24 = arith.constant dense<0.000000e+00> : vector<2x8x8xf32>
    %93 = tpu.matmul %92, %77, %cst_24 {dimension_numbers = #tpu.dot_dimension_numbers<[2], [1], [1], [2], [0, 0, 0, 1, 1, 2], [0], [0]>} : vector<2x8x8xf32>, vector<2x8x8xf32>, vector<2x8x8xf32> -> vector<2x8x8xf32>
    "tpu.trace_stop"() : () -> ()
    %94 = vector.extract_strided_slice %19 {offsets = [0, 0, 24], sizes = [2, 8, 8], strides = [1, 1, 1]} : vector<2x8x32xf32> to vector<2x8x8xf32>
    %95 = vector.extract_strided_slice %30 {offsets = [0, 0, 24], sizes = [2, 8, 8], strides = [1, 1, 1]} : vector<2x8x32xf32> to vector<2x8x8xf32>
    %96 = vector.extract_strided_slice %32 {offsets = [0, 0, 24], sizes = [2, 8, 8], strides = [1, 1, 1]} : vector<2x8x32xf32> to vector<2x8x8xf32>
    "tpu.trace_start"() <{level = 10 : i32, message = "btd,bsd->bts"}> : () -> ()
    %cst_25 = arith.constant dense<0.000000e+00> : vector<2x8x8xf32>
    %97 = tpu.matmul %94, %95, %cst_25 {dimension_numbers = #tpu.dot_dimension_numbers<[2], [2], [1], [1], [0, 0, 0, 1, 1, 1], [0], [0]>} : vector<2x8x8xf32>, vector<2x8x8xf32>, vector<2x8x8xf32> -> vector<2x8x8xf32>
    %cst_26 = arith.constant -1.000000e+30 : f32
    "tpu.trace_stop"() : () -> ()
    %98 = vector.shape_cast %36 : vector<1x8x8xi1> to vector<1x8x8xi1>
    %99 = vector.broadcast %98 : vector<1x8x8xi1> to vector<2x8x8xi1>
    %100 = vector.broadcast %cst_26 : f32 to vector<2x8x8xf32>
    %101 = arith.select %99, %97, %100 : vector<2x8x8xi1>, vector<2x8x8xf32>
    %cst_27 = arith.constant dense<0xFF800000> : vector<2x8xf32>
    %102 = vector.multi_reduction <maximumf>, %101, %cst_27 [2] : vector<2x8x8xf32> to vector<2x8xf32>
    %103 = vector.shape_cast %102 : vector<2x8xf32> to vector<2x8x1xf32>
    %104 = vector.broadcast %103 : vector<2x8x1xf32> to vector<2x8x8xf32>
    %105 = arith.subf %101, %104 : vector<2x8x8xf32>
    %106 = math.exp %105 : vector<2x8x8xf32>
    %cst_28 = arith.constant dense<0.000000e+00> : vector<2x8xf32>
    %107 = vector.multi_reduction <add>, %106, %cst_28 [2] : vector<2x8x8xf32> to vector<2x8xf32>
    %108 = vector.shape_cast %107 : vector<2x8xf32> to vector<2x8x1xf32>
    %109 = tpu.reciprocal %108 {approx = true} : vector<2x8x1xf32> -> vector<2x8x1xf32>
    %110 = vector.broadcast %109 : vector<2x8x1xf32> to vector<2x8x8xf32>
    %111 = arith.mulf %106, %110 : vector<2x8x8xf32>
    "tpu.trace_start"() <{level = 10 : i32, message = "bts,bsd->btd"}> : () -> ()
    %cst_29 = arith.constant dense<0.000000e+00> : vector<2x8x8xf32>
    %112 = tpu.matmul %111, %96, %cst_29 {dimension_numbers = #tpu.dot_dimension_numbers<[2], [1], [1], [2], [0, 0, 0, 1, 1, 2], [0], [0]>} : vector<2x8x8xf32>, vector<2x8x8xf32>, vector<2x8x8xf32> -> vector<2x8x8xf32>
    "tpu.trace_stop"() : () -> ()
    %113 = tpu.concatenate %55, %74, %93, %112 in 2 : vector<2x8x8xf32>, vector<2x8x8xf32>, vector<2x8x8xf32>, vector<2x8x8xf32> -> vector<2x8x32xf32>
    %114 = vector.shape_cast %113 : vector<2x8x32xf32> to vector<16x32xf32>
    %c0_30 = arith.constant 0 : index
    %c0_31 = arith.constant 0 : index
    %115 = vector.load %arg6[%c0_30, %c0_31] : memref<32x32xf32, #tpu.memory_space<vmem>>, vector<32x32xf32>
    %cst_32 = arith.constant dense<0.000000e+00> : vector<16x32xf32>
    %116 = tpu.matmul %114, %115, %cst_32 {dimension_numbers = #tpu.dot_dimension_numbers<[1], [0], [0], [1], [0, 0, 1, 1], [], []>} : vector<16x32xf32>, vector<32x32xf32>, vector<16x32xf32> -> vector<16x32xf32>
    %c0_33 = arith.constant 0 : index
    %c0_34 = arith.constant 0 : index
    %117 = vector.load %arg7[%c0_33, %c0_34] : memref<1x32xf32, #tpu.memory_space<vmem>>, vector<1x32xf32>
    %118 = vector.broadcast %117 : vector<1x32xf32> to vector<16x32xf32>
    %119 = arith.addf %116, %118 : vector<16x32xf32>
    %120 = vector.shape_cast %119 : vector<16x32xf32> to vector<2x8x32xf32>
    %c0_35 = arith.constant 0 : index
    %c0_36 = arith.constant 0 : index
    %c0_37 = arith.constant 0 : index
    %121 = vector.load %arg8[%c0_35, %c0_36, %c0_37] : memref<2x8x32xf32, #tpu.memory_space<vmem>>, vector<2x8x32xf32>
    tpu.vector_store %arg8[%c0_35, %c0_36, %c0_37], %120 {strides = array<i32>} : memref<2x8x32xf32, #tpu.memory_space<vmem>>, vector<2x8x32xf32>,
    return
  }
  func.func @transform_0(%arg0: i32) -> (i32, i32, i32) {
    %c0_i32 = arith.constant 0 : i32
    %c0_i32_0 = arith.constant 0 : i32
    %c0_i32_1 = arith.constant 0 : i32
    return %arg0, %c0_i32, %c0_i32_0 : i32, i32, i32
  }
  func.func @transform_1(%arg0: i32) -> (i32, i32) {
    %c0_i32 = arith.constant 0 : i32
    %c0_i32_0 = arith.constant 0 : i32
    %c0_i32_1 = arith.constant 0 : i32
    return %c0_i32, %c0_i32_0 : i32, i32
  }
  func.func @transform_2(%arg0: i32) -> (i32, i32) {
    %c0_i32 = arith.constant 0 : i32
    %c0_i32_0 = arith.constant 0 : i32
    %c0_i32_1 = arith.constant 0 : i32
    return %c0_i32, %c0_i32_0 : i32, i32
  }
  func.func @transform_3(%arg0: i32) -> (i32, i32) {
    %c0_i32 = arith.constant 0 : i32
    %c0_i32_0 = arith.constant 0 : i32
    %c0_i32_1 = arith.constant 0 : i32
    return %c0_i32, %c0_i32_0 : i32, i32
  }
  func.func @transform_4(%arg0: i32) -> (i32, i32) {
    %c0_i32 = arith.constant 0 : i32
    %c0_i32_0 = arith.constant 0 : i32
    %c0_i32_1 = arith.constant 0 : i32
    return %c0_i32, %c0_i32_0 : i32, i32
  }
  func.func @transform_5(%arg0: i32) -> (i32, i32) {
    %c0_i32 = arith.constant 0 : i32
    %c0_i32_0 = arith.constant 0 : i32
    %c0_i32_1 = arith.constant 0 : i32
    return %c0_i32, %c0_i32_0 : i32, i32
  }
  func.func @transform_6(%arg0: i32) -> (i32, i32) {
    %c0_i32 = arith.constant 0 : i32
    %c0_i32_0 = arith.constant 0 : i32
    %c0_i32_1 = arith.constant 0 : i32
    return %c0_i32, %c0_i32_0 : i32, i32
  }
  func.func @transform_7(%arg0: i32) -> (i32, i32, i32) {
    %c0_i32 = arith.constant 0 : i32
    %c0_i32_0 = arith.constant 0 : i32
    %c0_i32_1 = arith.constant 0 : i32
    return %arg0, %c0_i32, %c0_i32_0 : i32, i32, i32
  }
}

</mosaic_0001>

<llo_original>
// kernel: tpu_custom_call.1
$region0: #{tpu_custom_call.1}
  #allocation0 [shape = 'u32[]', space=smem, size = 0x4, offset = 0x4, fixed_abs, tag = 'smem constant byte address 0x4 - core index']
  #allocation1 [shape = 'u32[72,128]{1,0:T(1,128)}', space=vmem, size = 0x9000, scoped, tag = 'internal scratch']
  %s0 = inlined_call_operand.hbm [shape: f32[2,8,32], index: 0, kind: input, shape index: {}]
  %s1 = inlined_call_operand.hbm [shape: f32[32,160], index: 1, kind: input, shape index: {}]
  %s2 = inlined_call_operand.hbm [shape: f32[1,160], index: 2, kind: input, shape index: {}]
  %s3 = inlined_call_operand.hbm [shape: f32[8,32], index: 3, kind: input, shape index: {}]
  %s4 = inlined_call_operand.hbm [shape: f32[8,32], index: 4, kind: input, shape index: {}]
  %s5 = inlined_call_operand.hbm [shape: f32[32,32], index: 5, kind: input, shape index: {}]
  %s6 = inlined_call_operand.vmem [shape: f32[1,32], index: 6, kind: input, shape index: {}]
  %s7 = inlined_call_operand.hbm [shape: f32[2,8,32], index: 7, kind: output, shape index: {}]
  %s8 = sld [smem:[#allocation0]]
  $region62: #{tpu_custom_call.1} parent=0
    _
  %s10 = ssub.s32 1, %s8
  %s11 = scalar_select 0, %s10, %s8
  $region1: #{tpu_custom_call.1} parent=0
    #allocation2 [shape = 'u8[8192]{0}', space=vmem, size = 0x2000, scoped, tag = 'input window, operand 0, single buffered']
    #allocation3 [shape = 's32[1]{0}', space=sflag, size = 0x4, scoped, tag = 'scoped memory for tpu_custom_call.1']
    #allocation4 [shape = 's32[1]{0}', space=sflag, size = 0x4, scoped, tag = 'scoped memory for tpu_custom_call.1']
    #allocation5 [shape = 'u8[32768]{0}', space=vmem, size = 0x8000, scoped, tag = 'input window, operand 1, single buffered']
    #allocation6 [shape = 's32[1]{0}', space=sflag, size = 0x4, scoped, tag = 'scoped memory for tpu_custom_call.1']
    #allocation7 [shape = 'u8[1024]{0}', space=vmem, size = 0x400, scoped, tag = 'input window, operand 2, single buffered']
    #allocation8 [shape = 'u8[4096]{0}', space=vmem, size = 0x1000, scoped, tag = 'input window, operand 3, single buffered']
    #allocation9 [shape = 's32[1]{0}', space=sflag, size = 0x4, scoped, tag = 'scoped memory for tpu_custom_call.1']
    #allocation10 [shape = 'u8[4096]{0}', space=vmem, size = 0x1000, scoped, tag = 'input window, operand 4, single buffered']
    #allocation11 [shape = 'u8[16384]{0}', space=vmem, size = 0x4000, scoped, tag = 'input window, operand 5, single buffered']
    #allocation12 [shape = 's32[1]{0}', space=sflag, size = 0x4, scoped, tag = 'scoped memory for tpu_custom_call.1']
    #allocation13 [shape = 'u8[8192]{0}', space=vmem, size = 0x2000, scoped, tag = 'output window, operand 0, single buffered']
    %12 = vsyncpa [#allocation3], 0
    %13 = vsyncpa [#allocation6], 0
    %14 = vsyncpa [#allocation9], 0
    %15 = vsyncpa [#allocation12], 0
    %16 = vsyncpa [#allocation4], 0
    // Predicated region
    $region2: #{tpu_custom_call.1} parent=1 // pred_check
      _
    $region3: #{tpu_custom_call.1} parent=1 // pred_check_branch
      %18 = sbr.rel (0) target = $region5
    $region4: #{tpu_custom_call.1} parent=1 // pred_region
      %20 = vsyncadd [#allocation3], 0
      %s21 = sshll.u32 %s0, 4
      %s22 = int_to_ptr.hbm [resolvable:$true] %s21
      %s23 = sshll.u32 [#allocation2], 4
      %s24 = int_to_ptr.vmem [resolvable:$true] %s23
      %29 = dma.hbm_to_vmem [thread:$0]  %s22, 256, %s24, [#allocation3], 128, 128, 8
    $region5: #{tpu_custom_call.1} parent=1 // pred_fallthru
      _
    // Predicated region
    $region6: #{tpu_custom_call.1} parent=1 // pred_check
      _
    $region7: #{tpu_custom_call.1} parent=1 // pred_check_branch
      %31 = sbr.rel (0) target = $region9
    $region8: #{tpu_custom_call.1} parent=1 // pred_region
      %33 = vsyncadd [#allocation6], 0
      %s34 = sshll.u32 %s1, 4
      %s35 = int_to_ptr.hbm [resolvable:$true] %s34
      %s36 = sshll.u32 [#allocation5], 4
      %s37 = int_to_ptr.vmem [resolvable:$true] %s36
      %42 = dma.hbm_to_vmem [thread:$0]  %s35, 1024, %s37, [#allocation6], 256, 256, 16
    $region9: #{tpu_custom_call.1} parent=1 // pred_fallthru
      _
    // Predicated region
    $region10: #{tpu_custom_call.1} parent=1 // pred_check
      _
    $region11: #{tpu_custom_call.1} parent=1 // pred_check_branch
      %44 = sbr.rel (0) target = $region13
    $region12: #{tpu_custom_call.1} parent=1 // pred_region
      %46 = vsyncadd [#allocation6], 0
      %s48 = sshll.u32 %s2, 4
      %s49 = int_to_ptr.hbm [resolvable:$true] %s48
      %s50 = sshll.u32 [#allocation7], 4
      %s51 = int_to_ptr.vmem [resolvable:$true] %s50
      %53 = dma.hbm_to_vmem [thread:$0]  %s49, 32, %s51, [#allocation6]
    $region13: #{tpu_custom_call.1} parent=1 // pred_fallthru
      _
    // Predicated region
    $region14: #{tpu_custom_call.1} parent=1 // pred_check
      _
    $region15: #{tpu_custom_call.1} parent=1 // pred_check_branch
      %55 = sbr.rel (0) target = $region17
    $region16: #{tpu_custom_call.1} parent=1 // pred_region
      %57 = vsyncadd [#allocation9], 0
      %s59 = sshll.u32 %s3, 4
      %s60 = int_to_ptr.hbm [resolvable:$true] %s59
      %s61 = sshll.u32 [#allocation8], 4
      %s62 = int_to_ptr.vmem [resolvable:$true] %s61
      %64 = dma.hbm_to_vmem [thread:$0]  %s60, 128, %s62, [#allocation9]
    $region17: #{tpu_custom_call.1} parent=1 // pred_fallthru
      _
    // Predicated region
    $region18: #{tpu_custom_call.1} parent=1 // pred_check
      _
    $region19: #{tpu_custom_call.1} parent=1 // pred_check_branch
      %66 = sbr.rel (0) target = $region21
    $region20: #{tpu_custom_call.1} parent=1 // pred_region
      %68 = vsyncadd [#allocation9], 0
      %s70 = sshll.u32 %s4, 4
      %s71 = int_to_ptr.hbm [resolvable:$true] %s70
      %s72 = sshll.u32 [#allocation10], 4
      %s73 = int_to_ptr.vmem [resolvable:$true] %s72
      %75 = dma.hbm_to_vmem [thread:$0]  %s71, 128, %s73, [#allocation9]
    $region21: #{tpu_custom_call.1} parent=1 // pred_fallthru
      _
    // Predicated region
    $region22: #{tpu_custom_call.1} parent=1 // pred_check
      _
    $region23: #{tpu_custom_call.1} parent=1 // pred_check_branch
      %77 = sbr.rel (0) target = $region25
    $region24: #{tpu_custom_call.1} parent=1 // pred_region
      %79 = vsyncadd [#allocation12], 0
      %s80 = sshll.u32 %s5, 4
      %s81 = int_to_ptr.hbm [resolvable:$true] %s80
      %s82 = sshll.u32 [#allocation11], 4
      %s83 = int_to_ptr.vmem [resolvable:$true] %s82
      %88 = dma.hbm_to_vmem [thread:$0]  %s81, 512, %s83, [#allocation12], 128, 128, 8
    $region25: #{tpu_custom_call.1} parent=1 // pred_fallthru
      _
    // Predicated region
    $region26: #{tpu_custom_call.1} parent=1 // pred_check
      _
    $region27: #{tpu_custom_call.1} parent=1 // pred_check_branch
      %90 = sbr.rel (0) target = $region29
    $region28: #{tpu_custom_call.1} parent=1 // pred_region
      _
    $region29: #{tpu_custom_call.1} parent=1 // pred_fallthru
      _
    // Predicated region
    $region30: #{tpu_custom_call.1} parent=1 // pred_check
      _
    $region31: #{tpu_custom_call.1} parent=1 // pred_check_branch
      %92 = sbr.rel (0) target = $region33
    $region32: #{tpu_custom_call.1} parent=1 // pred_region
      %94 = dma.done [#allocation3], 256
    $region33: #{tpu_custom_call.1} parent=1 // pred_fallthru
      _
    // Predicated region
    $region34: #{tpu_custom_call.1} parent=1 // pred_check
      _
    $region35: #{tpu_custom_call.1} parent=1 // pred_check_branch
      %96 = sbr.rel (0) target = $region37
    $region36: #{tpu_custom_call.1} parent=1 // pred_region
      %98 = dma.done [#allocation6], 1024
    $region37: #{tpu_custom_call.1} parent=1 // pred_fallthru
      _
    // Predicated region
    $region38: #{tpu_custom_call.1} parent=1 // pred_check
      _
    $region39: #{tpu_custom_call.1} parent=1 // pred_check_branch
      %100 = sbr.rel (0) target = $region41
    $region40: #{tpu_custom_call.1} parent=1 // pred_region
      %102 = dma.done [#allocation6], 32
    $region41: #{tpu_custom_call.1} parent=1 // pred_fallthru
      _
    // Predicated region
    $region42: #{tpu_custom_call.1} parent=1 // pred_check
      _
    $region43: #{tpu_custom_call.1} parent=1 // pred_check_branch
      %104 = sbr.rel (0) target = $region45
    $region44: #{tpu_custom_call.1} parent=1 // pred_region
      %106 = dma.done [#allocation9], 128
    $region45: #{tpu_custom_call.1} parent=1 // pred_fallthru
      _
    // Predicated region
    $region46: #{tpu_custom_call.1} parent=1 // pred_check
      _
    $region47: #{tpu_custom_call.1} parent=1 // pred_check_branch
      %108 = sbr.rel (0) target = $region49
    $region48: #{tpu_custom_call.1} parent=1 // pred_region
      %110 = dma.done [#allocation9], 128
    $region49: #{tpu_custom_call.1} parent=1 // pred_fallthru
      _
    // Predicated region
    $region50: #{tpu_custom_call.1} parent=1 // pred_check
      _
    $region51: #{tpu_custom_call.1} parent=1 // pred_check_branch
      %112 = sbr.rel (0) target = $region53
    $region52: #{tpu_custom_call.1} parent=1 // pred_region
      %114 = dma.done [#allocation12], 512
    $region53: #{tpu_custom_call.1} parent=1 // pred_fallthru
      _
    %v115 = vld [vmem:[#allocation2] sm:$0xff]
    %v116 = vld [vmem:[#allocation2 + $0x8] sm:$0xff]
    %v117 = vld [vmem:[#allocation5] sm:$0xff]
    %v118 = vld [vmem:[#allocation5 + $0x8] sm:$0xff]
    %v119 = vld [vmem:[#allocation5 + $0x10] sm:$0xff]
    %v120 = vld [vmem:[#allocation5 + $0x18] sm:$0xff]
    %v121 = vld [vmem:[#allocation5 + $0x20] sm:$0xff]
    %v122 = vld [vmem:[#allocation5 + $0x28] sm:$0xff]
    %v123 = vld [vmem:[#allocation5 + $0x30] sm:$0xff]
    %v124 = vld [vmem:[#allocation5 + $0x38] sm:$0xff]
    %v125 = vld [vmem:[#allocation7] sm:$0x3]
    %v127 = vperm.slane %v125, 0
    %v128 = vperm.slane %v125, 1
    %vm131 = vcmask 261120
    %v133 = vsel %vm131, %v115, 0
    %v136 = vsel %vm131, %v116, 0
    %138 = vmatpush.msra.mxu0 0.0
    %139 = vmatpush.msra.mxu0 0.0
    %140 = vmatpush.msra.mxu0 0.0
    %141 = vmatpush.msra.mxu0 0.0
    %142 = vmatpush.msra.mxu0 0.0
    %143 = vmatpush.msra.mxu0 0.0
    %144 = vmatpush.msra.mxu0 0.0
    %145 = vmatpush.msra.mxu0 0.0
    %146 = vmatpush.msra.mxu0 0.0
    %147 = vmatpush.msra.mxu0 0.0
    %148 = vmatpush.msra.mxu0 0.0
    %149 = vmatpush.msra.mxu0 0.0
    %150 = vmatpush.msra.mxu0 %v123
    %151 = vmatpush.msra.mxu0 %v121
    %152 = vmatpush.msra.mxu0 %v119
    %153 = vmatpush.msra.mxu0 %v117
    %154 = vmatmul.f32.gmra.mxu0 %v133
    %v155 = vpop.f32.mrf.mxu0
    %v156 = vadd.f32 %v127, %v155
    %157 = vmatmul.f32.gmra.mxu0 %v136
    %v158 = vpop.f32.mrf.mxu0
    %v159 = vadd.f32 %v127, %v158
    %160 = vdwg.mxu0
    %161 = vmatpush.msra.mxu0 0.0
    %162 = vmatpush.msra.mxu0 0.0
    %163 = vmatpush.msra.mxu0 0.0
    %164 = vmatpush.msra.mxu0 0.0
    %165 = vmatpush.msra.mxu0 0.0
    %166 = vmatpush.msra.mxu0 0.0
    %167 = vmatpush.msra.mxu0 0.0
    %168 = vmatpush.msra.mxu0 0.0
    %169 = vmatpush.msra.mxu0 0.0
    %170 = vmatpush.msra.mxu0 0.0
    %171 = vmatpush.msra.mxu0 0.0
    %172 = vmatpush.msra.mxu0 0.0
    %173 = vmatpush.msra.mxu0 %v124
    %174 = vmatpush.msra.mxu0 %v122
    %175 = vmatpush.msra.mxu0 %v120
    %176 = vmatpush.msra.mxu0 %v118
    %177 = vmatmul.f32.gmra.mxu0 %v133
    %v178 = vpop.f32.mrf.mxu0
    %v179 = vadd.f32 %v128, %v178
    %180 = vmatmul.f32.gmra.mxu0 %v136
    %v181 = vpop.f32.mrf.mxu0
    %v182 = vadd.f32 %v128, %v181
    %183 = vdwg.mxu0
    %v184 = vld [vmem:[#allocation8] sm:$0xff]
    %v185 = vld [vmem:[#allocation10] sm:$0xff]
    %v186 = vmul.f32 %v156, %v184
    %v187 = vmul.f32 %v159, %v184
    %189 = vrot.lane.b32.xlu0 %v185, 32
    %v190 = vpop.permute.xlu0 %189
    %v192 = vmul.f32 %v156, %v190
    %v193 = vmul.f32 %v159, %v190
    %196 = vrot.lane.b32.xlu0 %v192, 96
    %v197 = vpop.permute.xlu0 %196
    %198 = vrot.lane.b32.xlu0 %v193, 96
    %v199 = vpop.permute.xlu0 %198
    %v202 = vadd.f32 %v186, %v197
    %v203 = vadd.f32 %v187, %v199
    %205 = vrot.lane.b32.xlu0 %v184, 64
    %v206 = vpop.permute.xlu0 %205
    %v208 = vmul.f32 %v156, %v206
    %v209 = vmul.f32 %v159, %v206
    %210 = vrot.lane.b32.xlu0 %v185, 96
    %v211 = vpop.permute.xlu0 %210
    %v213 = vmul.f32 %v156, %v211
    %v214 = vmul.f32 %v159, %v211
    %217 = vrot.lane.b32.xlu0 %v213, 96
    %v218 = vpop.permute.xlu0 %217
    %219 = vrot.lane.b32.xlu0 %v214, 96
    %v220 = vpop.permute.xlu0 %219
    %v223 = vadd.f32 %v208, %v218
    %v224 = vadd.f32 %v209, %v220
    %v225 = vlaneseq
    %v226 = vshrl.u32 %v225, 7
    %v227 = vlaneseq
    %v228 = vand.u32 %v227, 127
    %vm229 = vcmp.ge.s32.totalorder %v226, %v228
    %231 = vrot.lane.b32.xlu0 %v223, 64
    %v232 = vpop.permute.xlu0 %231
    %vm233 = vcmask 64512
    %v235 = vsel %vm233, %v202, 0
    %v237 = vsel %vm233, %v232, 0
    %239 = vmatpush.xpose.msra.mxu0 0.0
    %240 = vmatpush.xpose.msra.mxu0 0.0
    %241 = vmatpush.xpose.msra.mxu0 0.0
    %242 = vmatpush.xpose.msra.mxu0 0.0
    %243 = vmatpush.xpose.msra.mxu0 0.0
    %244 = vmatpush.xpose.msra.mxu0 0.0
    %245 = vmatpush.xpose.msra.mxu0 0.0
    %246 = vmatpush.xpose.msra.mxu0 0.0
    %247 = vmatpush.xpose.msra.mxu0 0.0
    %248 = vmatpush.xpose.msra.mxu0 0.0
    %249 = vmatpush.xpose.msra.mxu0 0.0
    %250 = vmatpush.xpose.msra.mxu0 0.0
    %251 = vmatpush.xpose.msra.mxu0 0.0
    %252 = vmatpush.xpose.msra.mxu0 0.0
    %253 = vmatpush.xpose.msra.mxu0 0.0
    %254 = vmatpush.xpose.msra.mxu0 %v237
    %255 = vmatmul.f32.gmra.mxu0 %v235
    %v256 = vpop.f32.mrf.mxu0
    %v257 = vadd.f32 0.0, %v256
    %258 = vdwg.mxu0
    %260 = vrot.lane.b32.xlu0 %v224, 64
    %v261 = vpop.permute.xlu0 %260
    %v263 = vsel %vm233, %v203, 0
    %v265 = vsel %vm233, %v261, 0
    %267 = vmatpush.xpose.msra.mxu0 0.0
    %268 = vmatpush.xpose.msra.mxu0 0.0
    %269 = vmatpush.xpose.msra.mxu0 0.0
    %270 = vmatpush.xpose.msra.mxu0 0.0
    %271 = vmatpush.xpose.msra.mxu0 0.0
    %272 = vmatpush.xpose.msra.mxu0 0.0
    %273 = vmatpush.xpose.msra.mxu0 0.0
    %274 = vmatpush.xpose.msra.mxu0 0.0
    %275 = vmatpush.xpose.msra.mxu0 0.0
    %276 = vmatpush.xpose.msra.mxu0 0.0
    %277 = vmatpush.xpose.msra.mxu0 0.0
    %278 = vmatpush.xpose.msra.mxu0 0.0
    %279 = vmatpush.xpose.msra.mxu0 0.0
    %280 = vmatpush.xpose.msra.mxu0 0.0
    %281 = vmatpush.xpose.msra.mxu0 0.0
    %282 = vmatpush.xpose.msra.mxu0 %v265
    %283 = vmatmul.f32.gmra.mxu0 %v263
    %v284 = vpop.f32.mrf.mxu0
    %v285 = vadd.f32 0.0, %v284
    %286 = vdwg.mxu0
    %v287 = vsel %vm229, 1, 0
    %vm288 = vcmp.eq.s32.totalorder %v287, 1
    %v289 = vsel %vm288, %v257, -1e+30
    %v290 = vsel %vm288, %v285, -1e+30
    %v291 = vsel %vm233, %v289, -inf
    %292 = vmax.xlane.f32.xlu0 %v291
    %v293 = vpop.xlane.xlu0 %292
    %v294 = vsel %vm233, %v290, -inf
    %295 = vmax.xlane.f32.xlu0 %v294
    %v296 = vpop.xlane.xlu0 %295
    %v297 = vsub.f32 %v289, %v293
    %v298 = vsub.f32 %v290, %v296
    %v299 = vmul.f32 %v297, 1.442695
    %v300 = vpow.pop %v299
    %v301 = vmul.f32 %v298, 1.442695
    %v302 = vpow.pop %v301
    %v303 = vsel %vm233, %v300, 0.0
    %304 = vadd.xlane.f32.xlu0 %v303
    %v305 = vpop.xlane.xlu0 %304
    %v306 = vsel %vm233, %v302, 0.0
    %307 = vadd.xlane.f32.xlu0 %v306
    %v308 = vpop.xlane.xlu0 %307
    %v309 = vrcp.pop %v305
    %v310 = vrcp.pop %v308
    %v311 = vmul.f32 %v300, %v309
    %v312 = vmul.f32 %v302, %v310
    %v314 = vsel %vm233, %v311, 0
    %316 = vmatpush.msra.mxu0 0.0
    %317 = vmatpush.msra.mxu0 0.0
    %318 = vmatpush.msra.mxu0 0.0
    %319 = vmatpush.msra.mxu0 0.0
    %320 = vmatpush.msra.mxu0 0.0
    %321 = vmatpush.msra.mxu0 0.0
    %322 = vmatpush.msra.mxu0 0.0
    %323 = vmatpush.msra.mxu0 0.0
    %324 = vmatpush.msra.mxu0 0.0
    %325 = vmatpush.msra.mxu0 0.0
    %326 = vmatpush.msra.mxu0 0.0
    %327 = vmatpush.msra.mxu0 0.0
    %328 = vmatpush.msra.mxu0 0.0
    %329 = vmatpush.msra.mxu0 0.0
    %330 = vmatpush.msra.mxu0 0.0
    %331 = vmatpush.msra.mxu0 %v179
    %332 = vmatmul.f32.gmra.mxu0 %v314
    %v333 = vpop.f32.mrf.mxu0
    %v334 = vadd.f32 0.0, %v333
    %335 = vdwg.mxu0
    %v337 = vsel %vm233, %v312, 0
    %339 = vmatpush.msra.mxu0 0.0
    %340 = vmatpush.msra.mxu0 0.0
    %341 = vmatpush.msra.mxu0 0.0
    %342 = vmatpush.msra.mxu0 0.0
    %343 = vmatpush.msra.mxu0 0.0
    %344 = vmatpush.msra.mxu0 0.0
    %345 = vmatpush.msra.mxu0 0.0
    %346 = vmatpush.msra.mxu0 0.0
    %347 = vmatpush.msra.mxu0 0.0
    %348 = vmatpush.msra.mxu0 0.0
    %349 = vmatpush.msra.mxu0 0.0
    %350 = vmatpush.msra.mxu0 0.0
    %351 = vmatpush.msra.mxu0 0.0
    %352 = vmatpush.msra.mxu0 0.0
    %353 = vmatpush.msra.mxu0 0.0
    %354 = vmatpush.msra.mxu0 %v182
    %355 = vmatmul.f32.gmra.mxu0 %v337
    %v356 = vpop.f32.mrf.mxu0
    %v357 = vadd.f32 0.0, %v356
    %358 = vdwg.mxu0
    %359 = vrot.lane.b32.xlu0 %v202, 120
    %v360 = vpop.permute.xlu0 %359
    %361 = vrot.lane.b32.xlu0 %v223, 56
    %v362 = vpop.permute.xlu0 %361
    %v363 = vsel %vm233, %v360, 0
    %v365 = vsel %vm233, %v362, 0
    %367 = vmatpush.xpose.msra.mxu0 0.0
    %368 = vmatpush.xpose.msra.mxu0 0.0
    %369 = vmatpush.xpose.msra.mxu0 0.0
    %370 = vmatpush.xpose.msra.mxu0 0.0
    %371 = vmatpush.xpose.msra.mxu0 0.0
    %372 = vmatpush.xpose.msra.mxu0 0.0
    %373 = vmatpush.xpose.msra.mxu0 0.0
    %374 = vmatpush.xpose.msra.mxu0 0.0
    %375 = vmatpush.xpose.msra.mxu0 0.0
    %376 = vmatpush.xpose.msra.mxu0 0.0
    %377 = vmatpush.xpose.msra.mxu0 0.0
    %378 = vmatpush.xpose.msra.mxu0 0.0
    %379 = vmatpush.xpose.msra.mxu0 0.0
    %380 = vmatpush.xpose.msra.mxu0 0.0
    %381 = vmatpush.xpose.msra.mxu0 0.0
    %382 = vmatpush.xpose.msra.mxu0 %v365
    %383 = vmatmul.f32.gmra.mxu0 %v363
    %v384 = vpop.f32.mrf.mxu0
    %v385 = vadd.f32 0.0, %v384
    %386 = vdwg.mxu0
    %387 = vrot.lane.b32.xlu0 %v203, 120
    %v388 = vpop.permute.xlu0 %387
    %389 = vrot.lane.b32.xlu0 %v224, 56
    %v390 = vpop.permute.xlu0 %389
    %v391 = vsel %vm233, %v388, 0
    %v393 = vsel %vm233, %v390, 0
    %395 = vmatpush.xpose.msra.mxu0 0.0
    %396 = vmatpush.xpose.msra.mxu0 0.0
    %397 = vmatpush.xpose.msra.mxu0 0.0
    %398 = vmatpush.xpose.msra.mxu0 0.0
    %399 = vmatpush.xpose.msra.mxu0 0.0
    %400 = vmatpush.xpose.msra.mxu0 0.0
    %401 = vmatpush.xpose.msra.mxu0 0.0
    %402 = vmatpush.xpose.msra.mxu0 0.0
    %403 = vmatpush.xpose.msra.mxu0 0.0
    %404 = vmatpush.xpose.msra.mxu0 0.0
    %405 = vmatpush.xpose.msra.mxu0 0.0
    %406 = vmatpush.xpose.msra.mxu0 0.0
    %407 = vmatpush.xpose.msra.mxu0 0.0
    %408 = vmatpush.xpose.msra.mxu0 0.0
    %409 = vmatpush.xpose.msra.mxu0 0.0
    %410 = vmatpush.xpose.msra.mxu0 %v393
    %411 = vmatmul.f32.gmra.mxu0 %v391
    %v412 = vpop.f32.mrf.mxu0
    %v413 = vadd.f32 0.0, %v412
    %414 = vdwg.mxu0
    %v415 = vsel %vm288, %v385, -1e+30
    %v416 = vsel %vm288, %v413, -1e+30
    %v417 = vsel %vm233, %v415, -inf
    %418 = vmax.xlane.f32.xlu0 %v417
    %v419 = vpop.xlane.xlu0 %418
    %v420 = vsel %vm233, %v416, -inf
    %421 = vmax.xlane.f32.xlu0 %v420
    %v422 = vpop.xlane.xlu0 %421
    %v423 = vsub.f32 %v415, %v419
    %v424 = vsub.f32 %v416, %v422
    %v425 = vmul.f32 %v423, 1.442695
    %v426 = vpow.pop %v425
    %v427 = vmul.f32 %v424, 1.442695
    %v428 = vpow.pop %v427
    %v429 = vsel %vm233, %v426, 0.0
    %430 = vadd.xlane.f32.xlu0 %v429
    %v431 = vpop.xlane.xlu0 %430
    %v432 = vsel %vm233, %v428, 0.0
    %433 = vadd.xlane.f32.xlu0 %v432
    %v434 = vpop.xlane.xlu0 %433
    %v435 = vrcp.pop %v431
    %v436 = vrcp.pop %v434
    %v437 = vmul.f32 %v426, %v435
    %v438 = vmul.f32 %v428, %v436
    %440 = vrot.lane.b32.xlu0 %v179, 120
    %v441 = vpop.permute.xlu0 %440
    %v444 = vsel %vm233, %v437, 0
    %446 = vmatpush.msra.mxu0 0.0
    %447 = vmatpush.msra.mxu0 0.0
    %448 = vmatpush.msra.mxu0 0.0
    %449 = vmatpush.msra.mxu0 0.0
    %450 = vmatpush.msra.mxu0 0.0
    %451 = vmatpush.msra.mxu0 0.0
    %452 = vmatpush.msra.mxu0 0.0
    %453 = vmatpush.msra.mxu0 0.0
    %454 = vmatpush.msra.mxu0 0.0
    %455 = vmatpush.msra.mxu0 0.0
    %456 = vmatpush.msra.mxu0 0.0
    %457 = vmatpush.msra.mxu0 0.0
    %458 = vmatpush.msra.mxu0 0.0
    %459 = vmatpush.msra.mxu0 0.0
    %460 = vmatpush.msra.mxu0 0.0
    %461 = vmatpush.msra.mxu0 %v441
    %462 = vmatmul.f32.gmra.mxu0 %v444
    %v463 = vpop.f32.mrf.mxu0
    %v464 = vadd.f32 0.0, %v463
    %465 = vdwg.mxu0
    %467 = vrot.lane.b32.xlu0 %v182, 120
    %v468 = vpop.permute.xlu0 %467
    %v471 = vsel %vm233, %v438, 0
    %473 = vmatpush.msra.mxu0 0.0
    %474 = vmatpush.msra.mxu0 0.0
    %475 = vmatpush.msra.mxu0 0.0
    %476 = vmatpush.msra.mxu0 0.0
    %477 = vmatpush.msra.mxu0 0.0
    %478 = vmatpush.msra.mxu0 0.0
    %479 = vmatpush.msra.mxu0 0.0
    %480 = vmatpush.msra.mxu0 0.0
    %481 = vmatpush.msra.mxu0 0.0
    %482 = vmatpush.msra.mxu0 0.0
    %483 = vmatpush.msra.mxu0 0.0
    %484 = vmatpush.msra.mxu0 0.0
    %485 = vmatpush.msra.mxu0 0.0
    %486 = vmatpush.msra.mxu0 0.0
    %487 = vmatpush.msra.mxu0 0.0
    %488 = vmatpush.msra.mxu0 %v468
    %489 = vmatmul.f32.gmra.mxu0 %v471
    %v490 = vpop.f32.mrf.mxu0
    %v491 = vadd.f32 0.0, %v490
    %492 = vdwg.mxu0
    %493 = vrot.lane.b32.xlu0 %v202, 112
    %v494 = vpop.permute.xlu0 %493
    %495 = vrot.lane.b32.xlu0 %v223, 48
    %v496 = vpop.permute.xlu0 %495
    %v497 = vsel %vm233, %v494, 0
    %v499 = vsel %vm233, %v496, 0
    %501 = vmatpush.xpose.msra.mxu0 0.0
    %502 = vmatpush.xpose.msra.mxu0 0.0
    %503 = vmatpush.xpose.msra.mxu0 0.0
    %504 = vmatpush.xpose.msra.mxu0 0.0
    %505 = vmatpush.xpose.msra.mxu0 0.0
    %506 = vmatpush.xpose.msra.mxu0 0.0
    %507 = vmatpush.xpose.msra.mxu0 0.0
    %508 = vmatpush.xpose.msra.mxu0 0.0
    %509 = vmatpush.xpose.msra.mxu0 0.0
    %510 = vmatpush.xpose.msra.mxu0 0.0
    %511 = vmatpush.xpose.msra.mxu0 0.0
    %512 = vmatpush.xpose.msra.mxu0 0.0
    %513 = vmatpush.xpose.msra.mxu0 0.0
    %514 = vmatpush.xpose.msra.mxu0 0.0
    %515 = vmatpush.xpose.msra.mxu0 0.0
    %516 = vmatpush.xpose.msra.mxu0 %v499
    %517 = vmatmul.f32.gmra.mxu0 %v497
    %v518 = vpop.f32.mrf.mxu0
    %v519 = vadd.f32 0.0, %v518
    %520 = vdwg.mxu0
    %521 = vrot.lane.b32.xlu0 %v203, 112
    %v522 = vpop.permute.xlu0 %521
    %523 = vrot.lane.b32.xlu0 %v224, 48
    %v524 = vpop.permute.xlu0 %523
    %v525 = vsel %vm233, %v522, 0
    %v527 = vsel %vm233, %v524, 0
    %529 = vmatpush.xpose.msra.mxu0 0.0
    %530 = vmatpush.xpose.msra.mxu0 0.0
    %531 = vmatpush.xpose.msra.mxu0 0.0
    %532 = vmatpush.xpose.msra.mxu0 0.0
    %533 = vmatpush.xpose.msra.mxu0 0.0
    %534 = vmatpush.xpose.msra.mxu0 0.0
    %535 = vmatpush.xpose.msra.mxu0 0.0
    %536 = vmatpush.xpose.msra.mxu0 0.0
    %537 = vmatpush.xpose.msra.mxu0 0.0
    %538 = vmatpush.xpose.msra.mxu0 0.0
    %539 = vmatpush.xpose.msra.mxu0 0.0
    %540 = vmatpush.xpose.msra.mxu0 0.0
    %541 = vmatpush.xpose.msra.mxu0 0.0
    %542 = vmatpush.xpose.msra.mxu0 0.0
    %543 = vmatpush.xpose.msra.mxu0 0.0
    %544 = vmatpush.xpose.msra.mxu0 %v527
    %545 = vmatmul.f32.gmra.mxu0 %v525
    %v546 = vpop.f32.mrf.mxu0
    %v547 = vadd.f32 0.0, %v546
    %548 = vdwg.mxu0
    %v549 = vsel %vm288, %v519, -1e+30
    %v550 = vsel %vm288, %v547, -1e+30
    %v551 = vsel %vm233, %v549, -inf
    %552 = vmax.xlane.f32.xlu0 %v551
    %v553 = vpop.xlane.xlu0 %552
    %v554 = vsel %vm233, %v550, -inf
    %555 = vmax.xlane.f32.xlu0 %v554
    %v556 = vpop.xlane.xlu0 %555
    %v557 = vsub.f32 %v549, %v553
    %v558 = vsub.f32 %v550, %v556
    %v559 = vmul.f32 %v557, 1.442695
    %v560 = vpow.pop %v559
    %v561 = vmul.f32 %v558, 1.442695
    %v562 = vpow.pop %v561
    %v563 = vsel %vm233, %v560, 0.0
    %564 = vadd.xlane.f32.xlu0 %v563
    %v565 = vpop.xlane.xlu0 %564
    %v566 = vsel %vm233, %v562, 0.0
    %567 = vadd.xlane.f32.xlu0 %v566
    %v568 = vpop.xlane.xlu0 %567
    %v569 = vrcp.pop %v565
    %v570 = vrcp.pop %v568
    %v571 = vmul.f32 %v560, %v569
    %v572 = vmul.f32 %v562, %v570
    %573 = vrot.lane.b32.xlu0 %v179, 112
    %v574 = vpop.permute.xlu0 %573
    %v577 = vsel %vm233, %v571, 0
    %579 = vmatpush.msra.mxu0 0.0
    %580 = vmatpush.msra.mxu0 0.0
    %581 = vmatpush.msra.mxu0 0.0
    %582 = vmatpush.msra.mxu0 0.0
    %583 = vmatpush.msra.mxu0 0.0
    %584 = vmatpush.msra.mxu0 0.0
    %585 = vmatpush.msra.mxu0 0.0
    %586 = vmatpush.msra.mxu0 0.0
    %587 = vmatpush.msra.mxu0 0.0
    %588 = vmatpush.msra.mxu0 0.0
    %589 = vmatpush.msra.mxu0 0.0
    %590 = vmatpush.msra.mxu0 0.0
    %591 = vmatpush.msra.mxu0 0.0
    %592 = vmatpush.msra.mxu0 0.0
    %593 = vmatpush.msra.mxu0 0.0
    %594 = vmatpush.msra.mxu0 %v574
    %595 = vmatmul.f32.gmra.mxu0 %v577
    %v596 = vpop.f32.mrf.mxu0
    %v597 = vadd.f32 0.0, %v596
    %598 = vdwg.mxu0
    %599 = vrot.lane.b32.xlu0 %v182, 112
    %v600 = vpop.permute.xlu0 %599
    %v603 = vsel %vm233, %v572, 0
    %605 = vmatpush.msra.mxu0 0.0
    %606 = vmatpush.msra.mxu0 0.0
    %607 = vmatpush.msra.mxu0 0.0
    %608 = vmatpush.msra.mxu0 0.0
    %609 = vmatpush.msra.mxu0 0.0
    %610 = vmatpush.msra.mxu0 0.0
    %611 = vmatpush.msra.mxu0 0.0
    %612 = vmatpush.msra.mxu0 0.0
    %613 = vmatpush.msra.mxu0 0.0
    %614 = vmatpush.msra.mxu0 0.0
    %615 = vmatpush.msra.mxu0 0.0
    %616 = vmatpush.msra.mxu0 0.0
    %617 = vmatpush.msra.mxu0 0.0
    %618 = vmatpush.msra.mxu0 0.0
    %619 = vmatpush.msra.mxu0 0.0
    %620 = vmatpush.msra.mxu0 %v600
    %621 = vmatmul.f32.gmra.mxu0 %v603
    %v622 = vpop.f32.mrf.mxu0
    %v623 = vadd.f32 0.0, %v622
    %624 = vdwg.mxu0
    %625 = vrot.lane.b32.xlu0 %v202, 104
    %v626 = vpop.permute.xlu0 %625
    %627 = vrot.lane.b32.xlu0 %v223, 40
    %v628 = vpop.permute.xlu0 %627
    %v629 = vsel %vm233, %v626, 0
    %v631 = vsel %vm233, %v628, 0
    %633 = vmatpush.xpose.msra.mxu0 0.0
    %634 = vmatpush.xpose.msra.mxu0 0.0
    %635 = vmatpush.xpose.msra.mxu0 0.0
    %636 = vmatpush.xpose.msra.mxu0 0.0
    %637 = vmatpush.xpose.msra.mxu0 0.0
    %638 = vmatpush.xpose.msra.mxu0 0.0
    %639 = vmatpush.xpose.msra.mxu0 0.0
    %640 = vmatpush.xpose.msra.mxu0 0.0
    %641 = vmatpush.xpose.msra.mxu0 0.0
    %642 = vmatpush.xpose.msra.mxu0 0.0
    %643 = vmatpush.xpose.msra.mxu0 0.0
    %644 = vmatpush.xpose.msra.mxu0 0.0
    %645 = vmatpush.xpose.msra.mxu0 0.0
    %646 = vmatpush.xpose.msra.mxu0 0.0
    %647 = vmatpush.xpose.msra.mxu0 0.0
    %648 = vmatpush.xpose.msra.mxu0 %v631
    %649 = vmatmul.f32.gmra.mxu0 %v629
    %v650 = vpop.f32.mrf.mxu0
    %v651 = vadd.f32 0.0, %v650
    %652 = vdwg.mxu0
    %653 = vrot.lane.b32.xlu0 %v203, 104
    %v654 = vpop.permute.xlu0 %653
    %655 = vrot.lane.b32.xlu0 %v224, 40
    %v656 = vpop.permute.xlu0 %655
    %v657 = vsel %vm233, %v654, 0
    %v659 = vsel %vm233, %v656, 0
    %661 = vmatpush.xpose.msra.mxu0 0.0
    %662 = vmatpush.xpose.msra.mxu0 0.0
    %663 = vmatpush.xpose.msra.mxu0 0.0
    %664 = vmatpush.xpose.msra.mxu0 0.0
    %665 = vmatpush.xpose.msra.mxu0 0.0
    %666 = vmatpush.xpose.msra.mxu0 0.0
    %667 = vmatpush.xpose.msra.mxu0 0.0
    %668 = vmatpush.xpose.msra.mxu0 0.0
    %669 = vmatpush.xpose.msra.mxu0 0.0
    %670 = vmatpush.xpose.msra.mxu0 0.0
    %671 = vmatpush.xpose.msra.mxu0 0.0
    %672 = vmatpush.xpose.msra.mxu0 0.0
    %673 = vmatpush.xpose.msra.mxu0 0.0
    %674 = vmatpush.xpose.msra.mxu0 0.0
    %675 = vmatpush.xpose.msra.mxu0 0.0
    %676 = vmatpush.xpose.msra.mxu0 %v659
    %677 = vmatmul.f32.gmra.mxu0 %v657
    %v678 = vpop.f32.mrf.mxu0
    %v679 = vadd.f32 0.0, %v678
    %680 = vdwg.mxu0
    %v681 = vsel %vm288, %v651, -1e+30
    %v682 = vsel %vm288, %v679, -1e+30
    %v683 = vsel %vm233, %v681, -inf
    %684 = vmax.xlane.f32.xlu0 %v683
    %v685 = vpop.xlane.xlu0 %684
    %v686 = vsel %vm233, %v682, -inf
    %687 = vmax.xlane.f32.xlu0 %v686
    %v688 = vpop.xlane.xlu0 %687
    %v689 = vsub.f32 %v681, %v685
    %v690 = vsub.f32 %v682, %v688
    %v691 = vmul.f32 %v689, 1.442695
    %v692 = vpow.pop %v691
    %v693 = vmul.f32 %v690, 1.442695
    %v694 = vpow.pop %v693
    %v695 = vsel %vm233, %v692, 0.0
    %696 = vadd.xlane.f32.xlu0 %v695
    %v697 = vpop.xlane.xlu0 %696
    %v698 = vsel %vm233, %v694, 0.0
    %699 = vadd.xlane.f32.xlu0 %v698
    %v700 = vpop.xlane.xlu0 %699
    %v701 = vrcp.pop %v697
    %v702 = vrcp.pop %v700
    %v703 = vmul.f32 %v692, %v701
    %v704 = vmul.f32 %v694, %v702
    %705 = vrot.lane.b32.xlu0 %v179, 104
    %v706 = vpop.permute.xlu0 %705
    %v709 = vsel %vm233, %v703, 0
    %711 = vmatpush.msra.mxu0 0.0
    %712 = vmatpush.msra.mxu0 0.0
    %713 = vmatpush.msra.mxu0 0.0
    %714 = vmatpush.msra.mxu0 0.0
    %715 = vmatpush.msra.mxu0 0.0
    %716 = vmatpush.msra.mxu0 0.0
    %717 = vmatpush.msra.mxu0 0.0
    %718 = vmatpush.msra.mxu0 0.0
    %719 = vmatpush.msra.mxu0 0.0
    %720 = vmatpush.msra.mxu0 0.0
    %721 = vmatpush.msra.mxu0 0.0
    %722 = vmatpush.msra.mxu0 0.0
    %723 = vmatpush.msra.mxu0 0.0
    %724 = vmatpush.msra.mxu0 0.0
    %725 = vmatpush.msra.mxu0 0.0
    %726 = vmatpush.msra.mxu0 %v706
    %727 = vmatmul.f32.gmra.mxu0 %v709
    %v728 = vpop.f32.mrf.mxu0
    %v729 = vadd.f32 0.0, %v728
    %730 = vdwg.mxu0
    %731 = vrot.lane.b32.xlu0 %v182, 104
    %v732 = vpop.permute.xlu0 %731
    %v735 = vsel %vm233, %v704, 0
    %737 = vmatpush.msra.mxu0 0.0
    %738 = vmatpush.msra.mxu0 0.0
    %739 = vmatpush.msra.mxu0 0.0
    %740 = vmatpush.msra.mxu0 0.0
    %741 = vmatpush.msra.mxu0 0.0
    %742 = vmatpush.msra.mxu0 0.0
    %743 = vmatpush.msra.mxu0 0.0
    %744 = vmatpush.msra.mxu0 0.0
    %745 = vmatpush.msra.mxu0 0.0
    %746 = vmatpush.msra.mxu0 0.0
    %747 = vmatpush.msra.mxu0 0.0
    %748 = vmatpush.msra.mxu0 0.0
    %749 = vmatpush.msra.mxu0 0.0
    %750 = vmatpush.msra.mxu0 0.0
    %751 = vmatpush.msra.mxu0 0.0
    %752 = vmatpush.msra.mxu0 %v732
    %753 = vmatmul.f32.gmra.mxu0 %v735
    %v754 = vpop.f32.mrf.mxu0
    %v755 = vadd.f32 0.0, %v754
    %756 = vdwg.mxu0
    %759 = vrot.lane.b32.xlu0 %v464, 8
    %v760 = vpop.permute.xlu0 %759
    %761 = vrot.lane.b32.xlu0 %v491, 8
    %v762 = vpop.permute.xlu0 %761
    %767 = vrot.lane.b32.xlu0 %v597, 16
    %v768 = vpop.permute.xlu0 %767
    %769 = vrot.lane.b32.xlu0 %v623, 16
    %v770 = vpop.permute.xlu0 %769
    %775 = vrot.lane.b32.xlu0 %v729, 24
    %v776 = vpop.permute.xlu0 %775
    %777 = vrot.lane.b32.xlu0 %v755, 24
    %v778 = vpop.permute.xlu0 %777
    %v781 = vsel %vm233, %v334, %v760
    %v782 = vsel %vm233, %v357, %v762
    %vm783 = vcmask 130048
    %v784 = vsel %vm783, %v781, %v768
    %v785 = vsel %vm783, %v782, %v770
    %vm786 = vcmask 195584
    %v787 = vsel %vm786, %v784, %v776
    %v788 = vsel %vm786, %v785, %v778
    %v789 = vld [vmem:[#allocation11] sm:$0xff]
    %v790 = vld [vmem:[#allocation11 + $0x8] sm:$0xff]
    %v791 = vld [vmem:[#allocation11 + $0x10] sm:$0xff]
    %v792 = vld [vmem:[#allocation11 + $0x18] sm:$0xff]
    %v793 = vld [vmem:[%s6] sm:$0x1]
    %v795 = vperm.slane %v793, 0
    %v798 = vsel %vm131, %v787, 0
    %v801 = vsel %vm131, %v788, 0
    %803 = vmatpush.msra.mxu0 0.0
    %804 = vmatpush.msra.mxu0 0.0
    %805 = vmatpush.msra.mxu0 0.0
    %806 = vmatpush.msra.mxu0 0.0
    %807 = vmatpush.msra.mxu0 0.0
    %808 = vmatpush.msra.mxu0 0.0
    %809 = vmatpush.msra.mxu0 0.0
    %810 = vmatpush.msra.mxu0 0.0
    %811 = vmatpush.msra.mxu0 0.0
    %812 = vmatpush.msra.mxu0 0.0
    %813 = vmatpush.msra.mxu0 0.0
    %814 = vmatpush.msra.mxu0 0.0
    %815 = vmatpush.msra.mxu0 %v792
    %816 = vmatpush.msra.mxu0 %v791
    %817 = vmatpush.msra.mxu0 %v790
    %818 = vmatpush.msra.mxu0 %v789
    %819 = vmatmul.f32.gmra.mxu0 %v798
    %v820 = vpop.f32.mrf.mxu0
    %v821 = vadd.f32 %v795, %v820
    %822 = vmatmul.f32.gmra.mxu0 %v801
    %v823 = vpop.f32.mrf.mxu0
    %v824 = vadd.f32 %v795, %v823
    %825 = vdwg.mxu0
    %826 = vst.msk [vmem:[#allocation13] sm:$0xff] %vm131, %v821
    %827 = vst.msk [vmem:[#allocation13 + $0x8] sm:$0xff] %vm131, %v824
    // Predicated region
    $region54: #{tpu_custom_call.1} parent=1 // pred_check
      _
    $region55: #{tpu_custom_call.1} parent=1 // pred_check_branch
      %829 = sbr.rel (0) target = $region57
    $region56: #{tpu_custom_call.1} parent=1 // pred_region
      %831 = vsyncadd [#allocation4], 0
      %s832 = sshll.u32 [#allocation13], 4
      %s833 = int_to_ptr.vmem [resolvable:$true] %s832
      %s834 = sshll.u32 %s7, 4
      %s835 = int_to_ptr.hbm [resolvable:$true] %s834
      %840 = dma.vmem_to_hbm [thread:$0]  %s833, 256, %s835, [#allocation4], 128, 128, 8
    $region57: #{tpu_custom_call.1} parent=1 // pred_fallthru
      _
    // Predicated region
    $region58: #{tpu_custom_call.1} parent=1 // pred_check
      _
    $region59: #{tpu_custom_call.1} parent=1 // pred_check_branch
      %842 = sbr.rel (0) target = $region61
    $region60: #{tpu_custom_call.1} parent=1 // pred_region
      %844 = dma.done [#allocation4], 256
    $region61: #{tpu_custom_call.1} parent=1 // pred_fallthru
      _
    %845 = vsyncpa [#allocation3], 1
    %846 = vsyncpa [#allocation6], 1
    %847 = vsyncpa [#allocation9], 1
    %848 = vsyncpa [#allocation12], 1
    %849 = vsyncpa [#allocation4], 1

</llo_original>
